<compile_context>
chip_gen: v7x
topology: tpu7x:2x2x1
jax: 0.10.0
libtpu: 0.0.40
codegen_flags: <defaults>
</compile_context>

<pallas_src>
import functools

import jax
import jax.numpy as jnp
from jax.experimental import pallas as pl
from jax.experimental.pallas import tpu as pltpu


def _linear_tanh_kernel(x_ref, w_ref, b_ref, o_ref):
    # One MXU pass with f32 accumulate; bias add (VPU) + tanh (EUP) in f32.
    acc = jnp.dot(x_ref[...], w_ref[...], preferred_element_type=jnp.float32)
    acc = acc + b_ref[...]  # (tm, N) + (1, N) broadcast
    o_ref[...] = jnp.tanh(acc).astype(o_ref.dtype)


def _round_up(a, m):
    return ((a + m - 1) // m) * m


@functools.partial(jax.jit, static_argnames=("tm_max", "use_core_parallel"))
def interact_attention_forward(x, weight_t, bias, *, tm_max=1024,
                               use_core_parallel=False):
    """x: (B, K), weight_t: (K, N), bias: (1, N) -> (B, N) == tanh(x @ W^T + b)."""
    B, K = x.shape
    K2, N = weight_t.shape
    assert K == K2
    assert bias.shape == (1, N)
    out_dtype = x.dtype

    # --- Batch tiling: tm multiple of 8 (f32 sublanes), capped for VMEM. ---
    tm = max(8, min(tm_max, _round_up(B, 8)))
    # Keep >=4 tiles in flight for pipelining once the batch is big enough.
    if B >= 4 * 128:
        tm = min(tm, _round_up(-(-B // 4), 8))
    grid = (pl.cdiv(B, tm),)  # ragged last block handled by Pallas masking

    itemsize = jnp.dtype(x.dtype).itemsize
    cost = pl.CostEstimate(
        flops=2 * B * K * N,
        transcendentals=B * N,
        bytes_accessed=(B * K + K * N + N) * itemsize
        + B * N * jnp.dtype(out_dtype).itemsize,
    )

    # On v7x, CORE_PARALLEL shards the batch tiles across both TensorCores.
    batch_sem = pltpu.CORE_PARALLEL if use_core_parallel else "parallel"

    out = pl.pallas_call(
        _linear_tanh_kernel,
        out_shape=jax.ShapeDtypeStruct((B, N), out_dtype),
        grid=grid,
        in_specs=[
            pl.BlockSpec((tm, K), lambda i: (i, 0)),  # streamed, double-buffered
            pl.BlockSpec((K, N), lambda i: (0, 0)),   # VMEM-resident weight
            pl.BlockSpec((1, N), lambda i: (0, 0)),   # VMEM-resident bias
        ],
        # N equals the full array dim, so a (tm, N) block is legal even for
        # N < 128; writing the real shape avoids a post-kernel slice pass.
        out_specs=pl.BlockSpec((tm, N), lambda i: (i, 0)),
        compiler_params=pltpu.CompilerParams(
            dimension_semantics=(batch_sem,),
        ),
        cost_estimate=cost,
    )(x, weight_t, bias)
    return out


def init_params(key, dim, num_tasks, dtype=jnp.float32):
    """Deterministic init matching nn.Linear's default (uniform +/- 1/sqrt(fan_in))."""
    in_features = num_tasks * dim
    out_features = dim
    k_w, k_b = jax.random.split(key)
    bound = 1.0 / jnp.sqrt(jnp.asarray(in_features, dtype))
    # PyTorch stores weight as (out, in); we keep the transposed (in, out) layout.
    weight_t = jax.random.uniform(
        k_w, (in_features, out_features), dtype=dtype, minval=-bound, maxval=bound
    )
    bias = jax.random.uniform(
        k_b, (1, out_features), dtype=dtype, minval=-bound, maxval=bound
    )
    return weight_t, bias


if __name__ == "__main__":
    dim = 32
    num_tasks = 4
    batch = 8

    key = jax.random.PRNGKey(0)
    k_x, k_p = jax.random.split(key)

    x = jax.random.normal(k_x, (batch, num_tasks * dim), dtype=jnp.float32)
    weight_t, bias = init_params(k_p, dim, num_tasks)

    out = interact_attention_forward(x, weight_t, bias)
    out = jax.block_until_ready(out)

    # Reference check in plain JAX (same math as the PyTorch module).
    ref = jnp.tanh(x @ weight_t + bias)
    assert out.shape == (batch, dim)
    assert jnp.allclose(out, ref, atol=1e-5, rtol=1e-5)

    # Larger, non-multiple batch: exercises the multi-tile grid and the ragged
    # (masked) last block without any wrapper-side padding.
    x_big = jax.random.normal(jax.random.PRNGKey(1), (1030, num_tasks * dim), jnp.float32)
    out_big = jax.block_until_ready(interact_attention_forward(x_big, weight_t, bias))
    ref_big = jnp.tanh(x_big @ weight_t + bias)
    assert out_big.shape == ref_big.shape
    assert jnp.allclose(out_big, ref_big, atol=1e-5, rtol=1e-5)

    print("KERNEL_OK")
</pallas_src>

<mosaic_0001>
module attributes {stable_mosaic.version = 11 : i64} {
  func.func @_linear_tanh_kernel(%arg0: i32, %arg1: memref<8x128xf32, #tpu.memory_space<vmem>>, %arg2: memref<128x32xf32, #tpu.memory_space<vmem>>, %arg3: memref<1x32xf32, #tpu.memory_space<vmem>>, %arg4: memref<8x32xf32, #tpu.memory_space<vmem>>) attributes {dimension_semantics = [#tpu.dimension_semantics<parallel>], iteration_bounds = array<i64: 1>, scalar_prefetch = 0 : i64, scratch_operands = 0 : i64, tpu.core_type = #tpu.core_type<tc>, window_params = [{transform_indices = @transform_0, window_bounds = array<i64: 8, 128>}, {pipeline_mode = #tpu.pipeline_mode<synchronous>, transform_indices = @transform_1, window_bounds = array<i64: 128, 32>}, {pipeline_mode = #tpu.pipeline_mode<synchronous>, transform_indices = @transform_2, window_bounds = array<i64: 1, 32>}, {transform_indices = @transform_3, window_bounds = array<i64: 8, 32>}]} {
    %c0 = arith.constant 0 : index
    %c0_0 = arith.constant 0 : index
    %0 = vector.load %arg1[%c0, %c0_0] : memref<8x128xf32, #tpu.memory_space<vmem>>, vector<8x128xf32>
    %c0_1 = arith.constant 0 : index
    %c0_2 = arith.constant 0 : index
    %1 = vector.load %arg2[%c0_1, %c0_2] : memref<128x32xf32, #tpu.memory_space<vmem>>, vector<128x32xf32>
    %cst = arith.constant dense<0.000000e+00> : vector<8x32xf32>
    %2 = tpu.matmul %0, %1, %cst {dimension_numbers = #tpu.dot_dimension_numbers<[1], [0], [0], [1], [0, 0, 1, 1], [], []>} : vector<8x128xf32>, vector<128x32xf32>, vector<8x32xf32> -> vector<8x32xf32>
    %c0_3 = arith.constant 0 : index
    %c0_4 = arith.constant 0 : index
    %3 = vector.load %arg3[%c0_3, %c0_4] : memref<1x32xf32, #tpu.memory_space<vmem>>, vector<1x32xf32>
    %4 = vector.broadcast %3 : vector<1x32xf32> to vector<8x32xf32>
    %5 = arith.addf %2, %4 : vector<8x32xf32>
    %6 = math.tanh %5 : vector<8x32xf32>
    %c0_5 = arith.constant 0 : index
    %c0_6 = arith.constant 0 : index
    %7 = vector.load %arg4[%c0_5, %c0_6] : memref<8x32xf32, #tpu.memory_space<vmem>>, vector<8x32xf32>
    tpu.vector_store %arg4[%c0_5, %c0_6], %6 {strides = array<i32>} : memref<8x32xf32, #tpu.memory_space<vmem>>, vector<8x32xf32>,
    return
  }
  func.func @transform_0(%arg0: i32) -> (i32, i32) {
    %c0_i32 = arith.constant 0 : i32
    %c0_i32_0 = arith.constant 0 : i32
    return %arg0, %c0_i32 : i32, i32
  }
  func.func @transform_1(%arg0: i32) -> (i32, i32) {
    %c0_i32 = arith.constant 0 : i32
    %c0_i32_0 = arith.constant 0 : i32
    %c0_i32_1 = arith.constant 0 : i32
    return %c0_i32, %c0_i32_0 : i32, i32
  }
  func.func @transform_2(%arg0: i32) -> (i32, i32) {
    %c0_i32 = arith.constant 0 : i32
    %c0_i32_0 = arith.constant 0 : i32
    %c0_i32_1 = arith.constant 0 : i32
    return %c0_i32, %c0_i32_0 : i32, i32
  }
  func.func @transform_3(%arg0: i32) -> (i32, i32) {
    %c0_i32 = arith.constant 0 : i32
    %c0_i32_0 = arith.constant 0 : i32
    return %arg0, %c0_i32 : i32, i32
  }
}

</mosaic_0001>

<llo_original>
// kernel: interact_attention_forward.1
$region0: #{interact_attention_forward.1}
  #allocation0 [shape = 'u32[]', space=smem, size = 0x4, offset = 0x4, fixed_abs, tag = 'smem constant byte address 0x4 - core index']
  #allocation1 [shape = 'u32[144,128]{1,0:T(1,128)}', space=vmem, size = 0x12000, scoped, tag = 'internal scratch']
  %s0 = inlined_call_operand.vmem [shape: f32[8,128], index: 0, kind: input, shape index: {}]
  %s1 = inlined_call_operand.vmem [shape: f32[128,32], index: 1, kind: input, shape index: {}]
  %s2 = inlined_call_operand.vmem [shape: f32[1,32], index: 2, kind: input, shape index: {}]
  %s3 = inlined_call_operand.hbm [shape: f32[8,32], index: 3, kind: output, shape index: {}]
  %s4 = sld [smem:[#allocation0]]
  $region22: #{interact_attention_forward.1} parent=0
    _
  %s6 = ssub.s32 1, %s4
  %s7 = scalar_select 0, %s6, %s4
  $region1: #{interact_attention_forward.1} parent=0
    #allocation2 [shape = 'u8[4096]{0}', space=vmem, size = 0x1000, scoped, tag = 'output window, operand 0, single buffered']
    #allocation3 [shape = 's32[1]{0}', space=sflag, size = 0x4, scoped, tag = 'scoped memory for interact_attention_forward.1']
    %8 = vsyncpa [#allocation3], 0
    // Predicated region
    $region2: #{interact_attention_forward.1} parent=1 // pred_check
      _
    $region3: #{interact_attention_forward.1} parent=1 // pred_check_branch
      %10 = sbr.rel (0) target = $region5
    $region4: #{interact_attention_forward.1} parent=1 // pred_region
      _
    $region5: #{interact_attention_forward.1} parent=1 // pred_fallthru
      _
    // Predicated region
    $region6: #{interact_attention_forward.1} parent=1 // pred_check
      _
    $region7: #{interact_attention_forward.1} parent=1 // pred_check_branch
      %12 = sbr.rel (0) target = $region9
    $region8: #{interact_attention_forward.1} parent=1 // pred_region
      _
    $region9: #{interact_attention_forward.1} parent=1 // pred_fallthru
      _
    // Predicated region
    $region10: #{interact_attention_forward.1} parent=1 // pred_check
      _
    $region11: #{interact_attention_forward.1} parent=1 // pred_check_branch
      %14 = sbr.rel (0) target = $region13
    $region12: #{interact_attention_forward.1} parent=1 // pred_region
      _
    $region13: #{interact_attention_forward.1} parent=1 // pred_fallthru
      _
    %v15 = vld [vmem:[%s0] sm:$0xff]
    %v16 = vld [vmem:[%s1] sm:$0xff]
    %v17 = vld [vmem:[%s1 + $0x8] sm:$0xff]
    %v18 = vld [vmem:[%s1 + $0x10] sm:$0xff]
    %v19 = vld [vmem:[%s1 + $0x18] sm:$0xff]
    %v20 = vld [vmem:[%s1 + $0x20] sm:$0xff]
    %v21 = vld [vmem:[%s1 + $0x28] sm:$0xff]
    %v22 = vld [vmem:[%s1 + $0x30] sm:$0xff]
    %v23 = vld [vmem:[%s1 + $0x38] sm:$0xff]
    %v24 = vld [vmem:[%s1 + $0x40] sm:$0xff]
    %v25 = vld [vmem:[%s1 + $0x48] sm:$0xff]
    %v26 = vld [vmem:[%s1 + $0x50] sm:$0xff]
    %v27 = vld [vmem:[%s1 + $0x58] sm:$0xff]
    %v28 = vld [vmem:[%s1 + $0x60] sm:$0xff]
    %v29 = vld [vmem:[%s1 + $0x68] sm:$0xff]
    %v30 = vld [vmem:[%s1 + $0x70] sm:$0xff]
    %v31 = vld [vmem:[%s1 + $0x78] sm:$0xff]
    %v32 = vld [vmem:[%s2] sm:$0x1]
    %v34 = vlaneseq
    %v35 = vshrl.u32 %v34, 7
    %v36 = vsub.s32 0, %v35
    %v37 = vrot.slane %v32, %v36
    %39 = vmatprep.subr.mxu0 0.0
    %40 = vmatpush1.msra.mxu0 %v16
    %41 = vmatprep.subr.mxu0 0.0
    %42 = vmatpush1.msra.mxu0 %v17
    %43 = vmatprep.subr.mxu0 0.0
    %44 = vmatpush1.msra.mxu0 %v18
    %45 = vmatprep.subr.mxu0 0.0
    %46 = vmatpush1.msra.mxu0 %v19
    %47 = vmatprep.subr.mxu0 0.0
    %48 = vmatpush1.msra.mxu0 %v20
    %49 = vmatprep.subr.mxu0 0.0
    %50 = vmatpush1.msra.mxu0 %v21
    %51 = vmatprep.subr.mxu0 0.0
    %52 = vmatpush1.msra.mxu0 %v22
    %53 = vmatprep.subr.mxu0 0.0
    %54 = vmatpush1.msra.mxu0 %v23
    %55 = vmatprep.subr.mxu0 0.0
    %56 = vmatpush1.msra.mxu0 %v24
    %57 = vmatprep.subr.mxu0 0.0
    %58 = vmatpush1.msra.mxu0 %v25
    %59 = vmatprep.subr.mxu0 0.0
    %60 = vmatpush1.msra.mxu0 %v26
    %61 = vmatprep.subr.mxu0 0.0
    %62 = vmatpush1.msra.mxu0 %v27
    %63 = vmatprep.subr.mxu0 0.0
    %64 = vmatpush1.msra.mxu0 %v28
    %65 = vmatprep.subr.mxu0 0.0
    %66 = vmatpush1.msra.mxu0 %v29
    %67 = vmatprep.subr.mxu0 0.0
    %68 = vmatpush1.msra.mxu0 %v30
    %69 = vmatprep.subr.mxu0 0.0
    %70 = vmatpush1.msra.mxu0 %v31
    %71 = vmatprep.subr.mxu0 0.0
    %72 = vmatpush1.msra.mxu0 0.0
    %73 = vmatprep.subr.mxu0 0.0
    %74 = vmatpush1.msra.mxu0 0.0
    %75 = vmatprep.subr.mxu0 0.0
    %76 = vmatpush1.msra.mxu0 0.0
    %77 = vmatprep.subr.mxu0 0.0
    %78 = vmatpush1.msra.mxu0 0.0
    %79 = vmatprep.subr.mxu0 0.0
    %80 = vmatpush1.msra.mxu0 0.0
    %81 = vmatprep.subr.mxu0 0.0
    %82 = vmatpush1.msra.mxu0 0.0
    %83 = vmatprep.subr.mxu0 0.0
    %84 = vmatpush1.msra.mxu0 0.0
    %85 = vmatprep.subr.mxu0 0.0
    %86 = vmatpush1.msra.mxu0 0.0
    %87 = vmatprep.subr.mxu0 0.0
    %88 = vmatpush1.msra.mxu0 0.0
    %89 = vmatprep.subr.mxu0 0.0
    %90 = vmatpush1.msra.mxu0 0.0
    %91 = vmatprep.subr.mxu0 0.0
    %92 = vmatpush1.msra.mxu0 0.0
    %93 = vmatprep.subr.mxu0 0.0
    %94 = vmatpush1.msra.mxu0 0.0
    %95 = vmatprep.subr.mxu0 0.0
    %96 = vmatpush1.msra.mxu0 0.0
    %97 = vmatprep.subr.mxu0 0.0
    %98 = vmatpush1.msra.mxu0 0.0
    %99 = vmatprep.subr.mxu0 0.0
    %100 = vmatpush1.msra.mxu0 0.0
    %101 = vmatprep.subr.mxu0 0.0
    %102 = vmatpush1.msra.mxu0 0.0
    %103 = vmatprep.mubr.f32.mxu0 0.0
    %104 = vmatmul.mubr.f32.gmra.mrb[0].mxu0 %v15
    %v105 = vpop.f32.mrb[0].mxu0
    %v106 = vadd.f32 %v37, %v105
    %v107 = vpop.f32.mrb[0].mxu0
    %108 = vdwg.mxu0
    %v109 = vtanh.pop %v106
    %vm110 = vcmask 261120
    %111 = vst.msk [vmem:[#allocation2] sm:$0xff] %vm110, %v109
    // Predicated region
    $region14: #{interact_attention_forward.1} parent=1 // pred_check
      _
    $region15: #{interact_attention_forward.1} parent=1 // pred_check_branch
      %113 = sbr.rel (0) target = $region17
    $region16: #{interact_attention_forward.1} parent=1 // pred_region
      %s115 = ssub.s32 128, 128
      %116 = vsyncadd [#allocation3], %s115
      %s118 = sshll.u32 [#allocation2], 4
      %s119 = int_to_ptr.vmem [resolvable:$true] %s118
      %121 = dma.vmem_to_hbm [thread:$0]  %s119, 128, %s3, [#allocation3]
    $region17: #{interact_attention_forward.1} parent=1 // pred_fallthru
      _
    // Predicated region
    $region18: #{interact_attention_forward.1} parent=1 // pred_check
      _
    $region19: #{interact_attention_forward.1} parent=1 // pred_check_branch
      %123 = sbr.rel (0) target = $region21
    $region20: #{interact_attention_forward.1} parent=1 // pred_region
      %124 = dma.done [#allocation3], 128
    $region21: #{interact_attention_forward.1} parent=1 // pred_fallthru
      _
    %125 = vsyncpa [#allocation3], 1

</llo_original>
